<compile_context>
chip_gen: v5e
topology: v5e:2x2
jax: 0.10.0
libtpu: 0.0.40
codegen_flags: <defaults>
</compile_context>

<pallas_src>
import functools

import jax
import jax.numpy as jnp
from jax.experimental import pallas as pl
from jax.experimental.pallas import tpu as pltpu

EPS = 1e-4

# Soft target for per-block *input* bytes: keeps the grid at several steps so
# the BlockSpec pipeline can hide block fetch/writeback behind compute
# (measured mem-bound sweet spot ~1-4 MiB blocks).  The VMEM budget stays the
# hard cap.
_TARGET_BLOCK_BYTES = 4 * 1024 * 1024
# Per element VMEM working set: double-buffered input + output pipeline
# buffers at the I/O dtype (4 copies) plus ~4 f32-sized in-kernel temporaries.
def _per_elem_vmem_bytes(itemsize: int) -> int:
    return 4 * itemsize + 4 * 4


def _round_up(x: int, m: int) -> int:
    return ((x + m - 1) // m) * m


def _round_down(x: int, m: int) -> int:
    return (x // m) * m


def _sublane_pack(itemsize: int) -> int:
    # f32 -> 8, bf16 -> 16, int8/fp8 -> 32 rows per (8,128) tile.
    return 8 * max(1, 4 // itemsize)


def _vmem_capacity_bytes() -> int:
    try:
        cap = getattr(pltpu.get_tpu_info(), "vmem_capacity_bytes", None)
        if cap:
            return int(cap)
    except Exception:
        pass
    # Conservative fallback = v7x per-TensorCore physical VMEM; safe everywhere.
    return 64 * 1024 * 1024


def _sigmoid_via_tanh(x):
    # sigmoid(x) == 0.5 * (tanh(x/2) + 1): one EUP op per element instead of
    # exp + reciprocal.
    return 0.5 * (jnp.tanh(0.5 * x) + 1.0)


# ----------------------------------------------------------------------------
# Single-pass kernel: the whole H*W row fits in one block.
# ----------------------------------------------------------------------------
def _svm_kernel(x_ref, o_ref, *, eps, hw):
    # x_ref: (TR, HW) block — TR independent (b, c) planes, full spatial row.
    # Out-of-bounds rows of a partial last block contain garbage, but rows are
    # independent and their stores are masked by Pallas, so no masking needed.
    # TODO(synk): on v7x with bf16 I/O the kernel turns VALU/EUP-bound; a bf16
    # elementwise chain (f32 only for the row sums) would trim per-element work.
    x = x_ref[...].astype(jnp.float32)

    inv_hw = 1.0 / hw
    spatial_mean = jnp.sum(x, axis=-1, keepdims=True) * inv_hw

    deviation = x - spatial_mean
    squared_deviation = deviation * deviation

    # Guard hw == 1 (PyTorch would produce NaN from 0/0); documented deviation.
    inv_nm1 = 1.0 / max(hw - 1, 1)
    spatial_variance = jnp.sum(squared_deviation, axis=-1, keepdims=True) * inv_nm1

    # Exact reciprocal: it only acts on the (TR, 1) stats column (negligible
    # cost) while an approx error would broadcast to every output element.
    inv_denom = pl.reciprocal(4.0 * (spatial_variance + eps), approx=False)
    modulation_coeff = squared_deviation * inv_denom + 0.5
    weight = _sigmoid_via_tanh(modulation_coeff)
    o_ref[...] = (x * weight).astype(o_ref.dtype)


# ----------------------------------------------------------------------------
# Two-pass (HW-chunked) fallback for H*W too large for a full-row block.
# ----------------------------------------------------------------------------
def _svm_stats_kernel(x_ref, mean_ref, inv_ref, sum_acc, sq_acc,
                      *, eps, hw, thw, mask_tail):
    j = pl.program_id(1)

    @pl.when(j == 0)
    def _():
        sum_acc[...] = jnp.zeros_like(sum_acc)
        sq_acc[...] = jnp.zeros_like(sq_acc)

    x = x_ref[...].astype(jnp.float32)
    if mask_tail:
        # Last HW chunk may overrun the real extent; zero OOB lanes so they
        # cannot leak garbage/NaN into the statistics.
        col = j * thw + jax.lax.broadcasted_iota(jnp.int32, x.shape, 1)
        x = jnp.where(col < hw, x, 0.0)

    sum_acc[...] = sum_acc[...] + jnp.sum(x, axis=-1, keepdims=True)
    sq_acc[...] = sq_acc[...] + jnp.sum(x * x, axis=-1, keepdims=True)

    @pl.when(j == pl.num_programs(1) - 1)
    def _():
        inv_hw = 1.0 / hw
        mean = sum_acc[...] * inv_hw
        # sum((x - mean)^2) == sum(x^2) - hw * mean^2 (f32 accumulation).
        ssd = jnp.maximum(sq_acc[...] - hw * (mean * mean), 0.0)
        var = ssd * (1.0 / max(hw - 1, 1))
        mean_ref[...] = mean
        inv_ref[...] = pl.reciprocal(4.0 * (var + eps), approx=False)


def _svm_apply_kernel(x_ref, mean_ref, inv_ref, o_ref):
    x = x_ref[...].astype(jnp.float32)
    deviation = x - mean_ref[...]
    squared_deviation = deviation * deviation
    modulation_coeff = squared_deviation * inv_ref[...] + 0.5
    weight = _sigmoid_via_tanh(modulation_coeff)
    o_ref[...] = (x * weight).astype(o_ref.dtype)


def _svm_two_pass(x2d, eps, *, pack, vmem_budget, vmem_cap, itemsize):
    BC, HW = x2d.shape
    dtype = x2d.dtype
    per_elem = _per_elem_vmem_bytes(itemsize)

    tr = BC if BC < pack else pack
    thw_budget = _round_down(vmem_budget // (tr * per_elem), 128)
    thw = max(128, min(thw_budget, _round_down(HW, 128)))

    g_r = pl.cdiv(BC, tr)
    g_hw = pl.cdiv(HW, thw)
    mask_tail = (HW % thw) != 0

    footprint = tr * thw * per_elem
    vmem_limit = int(max(8 << 20, min(vmem_cap * 9 // 10, footprint + (2 << 20))))

    stats_kernel = functools.partial(
        _svm_stats_kernel, eps=eps, hw=HW, thw=thw, mask_tail=mask_tail)

    mean, inv_denom = pl.pallas_call(
        stats_kernel,
        out_shape=(jax.ShapeDtypeStruct((BC, 1), jnp.float32),
                   jax.ShapeDtypeStruct((BC, 1), jnp.float32)),
        grid_spec=pltpu.PrefetchScalarGridSpec(
            num_scalar_prefetch=0,
            grid=(g_r, g_hw),
            in_specs=[pl.BlockSpec((tr, thw), lambda i, j: (i, j))],
            out_specs=[pl.BlockSpec((tr, 1), lambda i, j: (i, 0)),
                       pl.BlockSpec((tr, 1), lambda i, j: (i, 0))],
            scratch_shapes=[pltpu.VMEM((tr, 1), jnp.float32),
                            pltpu.VMEM((tr, 1), jnp.float32)],
        ),
        compiler_params=pltpu.CompilerParams(
            dimension_semantics=("parallel", "arbitrary"),
            vmem_limit_bytes=vmem_limit,
        ),
        cost_estimate=pl.CostEstimate(
            flops=4 * BC * HW, transcendentals=0,
            bytes_accessed=BC * HW * itemsize),
    )(x2d)

    out2d = pl.pallas_call(
        _svm_apply_kernel,
        out_shape=jax.ShapeDtypeStruct((BC, HW), dtype),
        grid_spec=pltpu.PrefetchScalarGridSpec(
            num_scalar_prefetch=0,
            grid=(g_r, g_hw),
            in_specs=[pl.BlockSpec((tr, thw), lambda i, j: (i, j)),
                      pl.BlockSpec((tr, 1), lambda i, j: (i, 0)),
                      pl.BlockSpec((tr, 1), lambda i, j: (i, 0))],
            out_specs=pl.BlockSpec((tr, thw), lambda i, j: (i, j)),
        ),
        compiler_params=pltpu.CompilerParams(
            dimension_semantics=("parallel", "parallel"),
            vmem_limit_bytes=vmem_limit,
        ),
        cost_estimate=pl.CostEstimate(
            flops=7 * BC * HW, transcendentals=BC * HW,   # 1 tanh / element
            bytes_accessed=2 * BC * HW * itemsize),
    )(x2d, mean, inv_denom)
    return out2d


# ----------------------------------------------------------------------------
# Public wrapper
# ----------------------------------------------------------------------------
def spatial_variance_modulation(
    feature_map: jax.Array,
    eps: float = EPS,
    *,
    force_two_pass: bool = False,
) -> jax.Array:
    """feature_map: (B, C, H, W) -> (B, C, H, W)."""
    B, C, H, W = feature_map.shape
    BC, HW = B * C, H * W
    dtype = feature_map.dtype
    itemsize = jnp.dtype(dtype).itemsize
    pack = _sublane_pack(itemsize)

    vmem_cap = _vmem_capacity_bytes()
    vmem_budget = vmem_cap * 3 // 4          # headroom for compiler scratch etc.

    per_row_bytes = HW * _per_elem_vmem_bytes(itemsize)
    io_row_bytes = HW * itemsize

    x2d = feature_map.reshape(BC, HW)        # metadata-only, no HBM copy

    # Two-pass fallback when even a minimal-row full-HW block blows VMEM
    # (on v7x's 64 MiB/TC this hits at ~half the H*W of v5e/v6e).
    needs_two_pass = min(BC, pack) * per_row_bytes > vmem_budget
    if (needs_two_pass or force_two_pass) and HW >= 256:
        out2d = _svm_two_pass(x2d, float(eps), pack=pack,
                              vmem_budget=vmem_budget, vmem_cap=vmem_cap,
                              itemsize=itemsize)
        return out2d.reshape(B, C, H, W)

    # ---- Single-pass row tiling --------------------------------------------
    if BC <= pack:
        tr, g = BC, 1                        # full-extent block, always legal
    else:
        max_steps = pl.cdiv(BC, pack)
        soft_steps = pl.cdiv(BC * io_row_bytes, _TARGET_BLOCK_BYTES)
        hard_steps = pl.cdiv(BC * per_row_bytes, vmem_budget)
        g = min(max(4, soft_steps, hard_steps), max_steps)
        if g > 1 and g % 2 == 1 and g < max_steps:
            g += 1                           # even split across v7x's two cores
        tr = max(pack, _round_down(pl.cdiv(BC, g), pack))
        g = pl.cdiv(BC, tr)                  # partial last block is masked

    footprint = tr * per_row_bytes
    vmem_limit = int(max(8 << 20, min(vmem_cap * 9 // 10, footprint + (2 << 20))))

    kernel = functools.partial(_svm_kernel, eps=float(eps), hw=HW)

    cost = pl.CostEstimate(
        flops=8 * BC * HW,
        transcendentals=BC * HW,             # one tanh per element
        bytes_accessed=2 * BC * HW * itemsize,
    )

    out2d = pl.pallas_call(
        kernel,
        out_shape=jax.ShapeDtypeStruct((BC, HW), dtype),
        grid_spec=pltpu.PrefetchScalarGridSpec(
            num_scalar_prefetch=0,
            grid=(g,),
            in_specs=[pl.BlockSpec((tr, HW), lambda i: (i, 0))],
            out_specs=pl.BlockSpec((tr, HW), lambda i: (i, 0)),
        ),
        compiler_params=pltpu.CompilerParams(
            dimension_semantics=("parallel",),
            vmem_limit_bytes=vmem_limit,
        ),
        cost_estimate=cost,
    )(x2d)

    return out2d.reshape(B, C, H, W)


def _reference(feature_map: jax.Array, eps: float = EPS) -> jax.Array:
    # Pure-JAX reference mirroring the PyTorch forward exactly.
    B, C, H, W = feature_map.shape
    x = feature_map.astype(jnp.float32)
    spatial_mean = jnp.mean(x, axis=(2, 3), keepdims=True)
    sq = (x - spatial_mean) ** 2
    var = jnp.sum(sq, axis=(2, 3), keepdims=True) / (H * W - 1)
    coeff = sq / (4.0 * (var + eps)) + 0.5
    w = jax.nn.sigmoid(coeff)
    return (x * w).astype(feature_map.dtype)


if __name__ == "__main__":
    key = jax.random.PRNGKey(0)
    keys = jax.random.split(key, 5)

    def _check(x, out, atol=1e-5, rtol=1e-5):
        ref = _reference(x)
        assert out.shape == ref.shape and out.dtype == ref.dtype
        assert jnp.allclose(out, ref, atol=atol, rtol=rtol), "mismatch"

    # 1) Aligned: BC = 8 rows, HW = 256 lanes -> one full block, no padding.
    x = jax.random.normal(keys[0], (2, 4, 16, 16), dtype=jnp.float32)
    _check(x, jax.block_until_ready(spatial_variance_modulation(x)))

    # 2) Unaligned: BC = 6 (< 8), HW = 49 (< 128) -> full-extent block dims,
    #    no wrapper pad/slice.
    x = jax.random.normal(keys[1], (2, 3, 7, 7), dtype=jnp.float32)
    _check(x, jax.block_until_ready(spatial_variance_modulation(x)))

    # 3) Partial last row block (BC = 20 with 8-row tiles, masked tail stores).
    x = jax.random.normal(keys[2], (5, 4, 16, 16), dtype=jnp.float32)
    _check(x, jax.block_until_ready(spatial_variance_modulation(x)))

    # 4) bf16 I/O exercising the 16-row sublane packing.
    xb = jax.random.normal(keys[3], (2, 16, 16, 16), dtype=jnp.bfloat16)
    _check(xb, jax.block_until_ready(spatial_variance_modulation(xb)),
           atol=2e-2, rtol=2e-2)

    # 5) Forced two-pass HW-chunked fallback with OOB rows (BC = 12) and a
    #    lane-tail (HW = 300) to exercise the chunked accumulation + masking.
    x = jax.random.normal(keys[4], (3, 4, 10, 30), dtype=jnp.float32)
    _check(x, jax.block_until_ready(
        spatial_variance_modulation(x, force_two_pass=True)))

    print("KERNEL_OK")
</pallas_src>

<mosaic_0001>
module attributes {stable_mosaic.version = 11 : i64} {
  func.func @_svm_kernel(%arg0: i32, %arg1: memref<8x256xf32, #tpu.memory_space<vmem>>, %arg2: memref<8x256xf32, #tpu.memory_space<vmem>>) attributes {dimension_semantics = [#tpu.dimension_semantics<parallel>], iteration_bounds = array<i64: 1>, scalar_prefetch = 0 : i64, scratch_operands = 0 : i64, tpu.core_type = #tpu.core_type<tc>, window_params = [{transform_indices = @transform_0, window_bounds = array<i64: 8, 256>}, {transform_indices = @transform_1, window_bounds = array<i64: 8, 256>}]} {
    %c0 = arith.constant 0 : index
    %c0_0 = arith.constant 0 : index
    %0 = vector.load %arg1[%c0, %c0_0] : memref<8x256xf32, #tpu.memory_space<vmem>>, vector<8x256xf32>
    %cst = arith.constant dense<0.000000e+00> : vector<8xf32>
    %1 = vector.multi_reduction <add>, %0, %cst [1] : vector<8x256xf32> to vector<8xf32>
    %2 = vector.shape_cast %1 : vector<8xf32> to vector<8x1xf32>
    %cst_1 = arith.constant 3.906250e-03 : f32
    %3 = vector.broadcast %cst_1 : f32 to vector<8x1xf32>
    %4 = arith.mulf %2, %3 : vector<8x1xf32>
    %5 = vector.broadcast %4 : vector<8x1xf32> to vector<8x256xf32>
    %6 = arith.subf %0, %5 : vector<8x256xf32>
    %7 = arith.mulf %6, %6 : vector<8x256xf32>
    %cst_2 = arith.constant dense<0.000000e+00> : vector<8xf32>
    %8 = vector.multi_reduction <add>, %7, %cst_2 [1] : vector<8x256xf32> to vector<8xf32>
    %9 = vector.shape_cast %8 : vector<8xf32> to vector<8x1xf32>
    %cst_3 = arith.constant 0.00392156886 : f32
    %10 = vector.broadcast %cst_3 : f32 to vector<8x1xf32>
    %11 = arith.mulf %9, %10 : vector<8x1xf32>
    %cst_4 = arith.constant 9.99999974E-5 : f32
    %12 = vector.broadcast %cst_4 : f32 to vector<8x1xf32>
    %13 = arith.addf %11, %12 : vector<8x1xf32>
    %cst_5 = arith.constant 4.000000e+00 : f32
    %14 = vector.broadcast %cst_5 : f32 to vector<8x1xf32>
    %15 = arith.mulf %14, %13 : vector<8x1xf32>
    %16 = tpu.reciprocal %15 : vector<8x1xf32> -> vector<8x1xf32>
    %17 = vector.broadcast %16 : vector<8x1xf32> to vector<8x256xf32>
    %18 = arith.mulf %7, %17 : vector<8x256xf32>
    %cst_6 = arith.constant 5.000000e-01 : f32
    %19 = vector.broadcast %cst_6 : f32 to vector<8x256xf32>
    %20 = arith.addf %18, %19 : vector<8x256xf32>
    %cst_7 = arith.constant 5.000000e-01 : f32
    %21 = vector.broadcast %cst_7 : f32 to vector<8x256xf32>
    %22 = arith.mulf %21, %20 : vector<8x256xf32>
    %23 = math.tanh %22 : vector<8x256xf32>
    %cst_8 = arith.constant 1.000000e+00 : f32
    %24 = vector.broadcast %cst_8 : f32 to vector<8x256xf32>
    %25 = arith.addf %23, %24 : vector<8x256xf32>
    %cst_9 = arith.constant 5.000000e-01 : f32
    %26 = vector.broadcast %cst_9 : f32 to vector<8x256xf32>
    %27 = arith.mulf %26, %25 : vector<8x256xf32>
    %28 = arith.mulf %0, %27 : vector<8x256xf32>
    %c0_10 = arith.constant 0 : index
    %c0_11 = arith.constant 0 : index
    %29 = vector.load %arg2[%c0_10, %c0_11] : memref<8x256xf32, #tpu.memory_space<vmem>>, vector<8x256xf32>
    tpu.vector_store %arg2[%c0_10, %c0_11], %28 {strides = array<i32>} : memref<8x256xf32, #tpu.memory_space<vmem>>, vector<8x256xf32>,
    return
  }
  func.func @transform_0(%arg0: i32) -> (i32, i32) {
    %c0_i32 = arith.constant 0 : i32
    %c0_i32_0 = arith.constant 0 : i32
    return %arg0, %c0_i32 : i32, i32
  }
  func.func @transform_1(%arg0: i32) -> (i32, i32) {
    %c0_i32 = arith.constant 0 : i32
    %c0_i32_0 = arith.constant 0 : i32
    return %arg0, %c0_i32 : i32, i32
  }
}

</mosaic_0001>

<llo_original>
// kernel: tpu_custom_call.1
$region0: #{tpu_custom_call.1}
  #allocation0 [shape = 'u32[]', space=smem, size = 0x4, offset = 0x4, fixed_abs, tag = 'smem constant byte address 0x4 - core index']
  #allocation1 [shape = 'u32[72,128]{1,0:T(1,128)}', space=vmem, size = 0x9000, scoped, tag = 'internal scratch']
  %s0 = inlined_call_operand.hbm [shape: f32[8,256], index: 0, kind: input, shape index: {}]
  %s1 = inlined_call_operand.hbm [shape: f32[8,256], index: 1, kind: output, shape index: {}]
  %s2 = sld [smem:[#allocation0]]
  $region18: #{tpu_custom_call.1} parent=0
    _
  %s4 = ssub.s32 1, %s2
  %s5 = scalar_select 0, %s4, %s2
  $region1: #{tpu_custom_call.1} parent=0
    #allocation2 [shape = 'u8[8192]{0}', space=vmem, size = 0x2000, scoped, tag = 'input window, operand 0, single buffered']
    #allocation3 [shape = 's32[1]{0}', space=sflag, size = 0x4, scoped, tag = 'scoped memory for tpu_custom_call.1']
    #allocation4 [shape = 's32[1]{0}', space=sflag, size = 0x4, scoped, tag = 'scoped memory for tpu_custom_call.1']
    #allocation5 [shape = 'u8[8192]{0}', space=vmem, size = 0x2000, scoped, tag = 'output window, operand 0, single buffered']
    %6 = vsyncpa [#allocation3], 0
    %7 = vsyncpa [#allocation4], 0
    // Predicated region
    $region2: #{tpu_custom_call.1} parent=1 // pred_check
      _
    $region3: #{tpu_custom_call.1} parent=1 // pred_check_branch
      %9 = sbr.rel (0) target = $region5
    $region4: #{tpu_custom_call.1} parent=1 // pred_region
      %11 = vsyncadd [#allocation3], 0
      %s13 = sshll.u32 %s0, 4
      %s14 = int_to_ptr.hbm [resolvable:$true] %s13
      %s15 = sshll.u32 [#allocation2], 4
      %s16 = int_to_ptr.vmem [resolvable:$true] %s15
      %18 = dma.hbm_to_vmem [thread:$0]  %s14, 256, %s16, [#allocation3]
    $region5: #{tpu_custom_call.1} parent=1 // pred_fallthru
      _
    // Predicated region
    $region6: #{tpu_custom_call.1} parent=1 // pred_check
      _
    $region7: #{tpu_custom_call.1} parent=1 // pred_check_branch
      %20 = sbr.rel (0) target = $region9
    $region8: #{tpu_custom_call.1} parent=1 // pred_region
      %22 = dma.done [#allocation3], 256
    $region9: #{tpu_custom_call.1} parent=1 // pred_fallthru
      _
    %v23 = vld [vmem:[#allocation2] sm:$0xff]
    %v24 = vld [vmem:[#allocation2 + $0x8] sm:$0xff]
    %v25 = vadd.f32 %v23, %v24
    %26 = vadd.xlane.f32.xlu0 %v25
    %v27 = vpop.xlane.xlu0 %26
    %v28 = vmul.f32 %v27, 0.00390625
    %v29 = vsub.f32 %v23, %v28
    %v30 = vsub.f32 %v24, %v28
    %v31 = vmul.f32 %v29, %v29
    %v32 = vmul.f32 %v30, %v30
    %v33 = vadd.f32 %v31, %v32
    %34 = vadd.xlane.f32.xlu0 %v33
    %v35 = vpop.xlane.xlu0 %34
    %v36 = vmul.f32 %v35, 0.003921569
    %v37 = vadd.f32 %v36, 0.0001
    %v38 = vmul.f32 %v37, 4.0
    %v39 = vrcp.pop %v38
    %v40 = vmul.f32 %v38, %v39
    %v41 = vsub.f32 1.0, %v40
    %v42 = vmul.f32 %v39, %v41
    %v43 = vadd.f32 %v39, %v42
    %vm44 = vweird.f32 %v38
    %vm45 = vweird.f32 %v39
    %vm46 = vmor %vm44, %vm45
    %v47 = vsel %vm46, %v39, %v43
    %v48 = vand.u32 2147483647, %v38
    %vm49 = vcmp.eq.f32.partialorder %v48, 8.507059e+37
    %v50 = vand.u32 %v38, 2147483648
    %v51 = vor.u32 1.1754944e-38, %v50
    %v52 = vsel %vm49, %v51, %v47
    %v53 = vmul.f32 %v31, %v52
    %v54 = vmul.f32 %v32, %v52
    %v55 = vadd.f32 %v53, 0.5
    %v56 = vadd.f32 %v54, 0.5
    %v57 = vmul.f32 %v55, 0.5
    %v58 = vmul.f32 %v56, 0.5
    %v59 = vtanh.pop %v57
    %v60 = vtanh.pop %v58
    %v61 = vadd.f32 %v59, 1.0
    %v62 = vadd.f32 %v60, 1.0
    %v63 = vmul.f32 %v61, 0.5
    %v64 = vmul.f32 %v62, 0.5
    %v65 = vmul.f32 %v23, %v63
    %v66 = vmul.f32 %v24, %v64
    %67 = vst [vmem:[#allocation5] sm:$0xff] %v65
    %68 = vst [vmem:[#allocation5 + $0x8] sm:$0xff] %v66
    // Predicated region
    $region10: #{tpu_custom_call.1} parent=1 // pred_check
      _
    $region11: #{tpu_custom_call.1} parent=1 // pred_check_branch
      %70 = sbr.rel (0) target = $region13
    $region12: #{tpu_custom_call.1} parent=1 // pred_region
      %72 = vsyncadd [#allocation4], 0
      %s74 = sshll.u32 [#allocation5], 4
      %s75 = int_to_ptr.vmem [resolvable:$true] %s74
      %s76 = sshll.u32 %s1, 4
      %s77 = int_to_ptr.hbm [resolvable:$true] %s76
      %79 = dma.vmem_to_hbm [thread:$0]  %s75, 256, %s77, [#allocation4]
    $region13: #{tpu_custom_call.1} parent=1 // pred_fallthru
      _
    // Predicated region
    $region14: #{tpu_custom_call.1} parent=1 // pred_check
      _
    $region15: #{tpu_custom_call.1} parent=1 // pred_check_branch
      %81 = sbr.rel (0) target = $region17
    $region16: #{tpu_custom_call.1} parent=1 // pred_region
      %83 = dma.done [#allocation4], 256
    $region17: #{tpu_custom_call.1} parent=1 // pred_fallthru
      _
    %84 = vsyncpa [#allocation3], 1
    %85 = vsyncpa [#allocation4], 1

</llo_original>
